<compile_context>
chip_gen: v7x
topology: tpu7x:2x2x1
jax: 0.10.0
libtpu: 0.0.40
codegen_flags: <defaults>
</compile_context>

<pallas_src>
import functools

import jax
import jax.numpy as jnp
from jax import lax
from jax.experimental import pallas as pl
from jax.experimental.pallas import tpu as pltpu


LN_EPS = 1e-5  # torch.nn.LayerNorm default


def _embedding_ln_kernel(tok_ids_smem,          # (B, S) int32   SMEM (scalar prefetch)
                         tok_hbm,               # (V, D) f32     HBM  (pl.ANY)
                         seg_ids_ref,           # (1, T, 1) i32  VMEM
                         pos_ref,               # (T, D) f32     VMEM (pre-gathered rows)
                         seg_tab_ref,           # (n_seg, D) f32 VMEM
                         gamma_ref, beta_ref,   # (1, D) f32     VMEM
                         out_ref,               # (1, T, D) f32  VMEM
                         tok_buf, sem):         # scratch: (T, D) f32, DMA sems (T,)
    b = pl.program_id(0)
    s = pl.program_id(1)
    t, d = tok_buf.shape
    base = s * t

    # ---- token embedding: DMA row-gather from the HBM-resident table -------
    @pl.loop(0, t)
    def _issue(r):
        tid = tok_ids_smem[b, base + r]
        pltpu.make_async_copy(tok_hbm.at[pl.ds(tid, 1), :],
                              tok_buf.at[pl.ds(r, 1), :],
                              sem.at[r]).start()

    @pl.loop(0, t)
    def _wait(r):
        pltpu.make_async_copy(tok_hbm.at[pl.ds(0, 1), :],
                              tok_buf.at[pl.ds(r, 1), :],
                              sem.at[r]).wait()

    tok_emb = tok_buf[...]                          # (T, D) f32

    # ---- positional embedding: arrived pre-gathered via BlockSpec DMA ------
    pos_emb = pos_ref[...]                          # (T, D) f32

    # ---- segment embedding: tiny table -> unrolled VPU select (no MXU) -----
    seg_ids = seg_ids_ref[0]                        # (T, 1) int32
    n_seg = seg_tab_ref.shape[0]
    seg_emb = jnp.zeros((t, d), dtype=jnp.float32)
    for k in range(n_seg):                          # n_seg is tiny and static
        seg_emb = jnp.where(seg_ids == k, seg_tab_ref[k:k + 1, :], seg_emb)

    # ---- fused add + LayerNorm over d_model ---------------------------------
    emb = tok_emb + pos_emb + seg_emb
    mean = jnp.mean(emb, axis=-1, keepdims=True)
    centered = emb - mean
    var = jnp.mean(centered * centered, axis=-1, keepdims=True)
    normed = centered * lax.rsqrt(var + LN_EPS)
    out_ref[0] = normed * gamma_ref[...] + beta_ref[...]


def _pick_seq_tile(S, target=256):
    assert S % 8 == 0, "seq_len must be a multiple of 8"
    best = 8
    for cand in range(8, min(S, target) + 1, 8):
        if S % cand == 0:
            best = cand
    return best


@functools.partial(jax.jit, static_argnames=("seq_tile",))
def _embedding_forward_impl(x, seg, tok_tab, pos_tab, seg_tab, gamma, beta,
                            seq_tile):
    B, S = x.shape
    V, D = tok_tab.shape
    max_len = pos_tab.shape[0]
    n_seg = seg_tab.shape[0]
    assert S % seq_tile == 0 and seq_tile % 8 == 0
    assert S <= max_len
    assert D % 128 == 0

    # Clamp token ids so an out-of-range id can never trigger an OOB HBM DMA.
    tok_ids = jnp.clip(x.astype(jnp.int32), 0, V - 1)      # (B, S) -> SMEM prefetch
    seg_ids3 = seg.astype(jnp.int32).reshape(B, S, 1)      # (B, S, 1) -> VMEM blocks
    gamma2 = gamma.reshape(1, D).astype(jnp.float32)
    beta2 = beta.reshape(1, D).astype(jnp.float32)

    grid = (B, S // seq_tile)

    grid_spec = pltpu.PrefetchScalarGridSpec(
        num_scalar_prefetch=1,
        grid=grid,
        in_specs=[
            pl.BlockSpec(memory_space=pl.ANY),                            # tok table (HBM)
            pl.BlockSpec((1, seq_tile, 1), lambda b, s, ids: (b, s, 0)),  # seg ids
            pl.BlockSpec((seq_tile, D), lambda b, s, ids: (s, 0)),        # pos rows
            pl.BlockSpec((n_seg, D), lambda b, s, ids: (0, 0)),           # seg table
            pl.BlockSpec((1, D), lambda b, s, ids: (0, 0)),               # gamma
            pl.BlockSpec((1, D), lambda b, s, ids: (0, 0)),               # beta
        ],
        out_specs=pl.BlockSpec((1, seq_tile, D), lambda b, s, ids: (b, s, 0)),
        scratch_shapes=[
            pltpu.VMEM((seq_tile, D), jnp.float32),      # gathered token rows
            pltpu.SemaphoreType.DMA((seq_tile,)),        # one sem per gather DMA
        ],
    )

    return pl.pallas_call(
        _embedding_ln_kernel,
        out_shape=jax.ShapeDtypeStruct((B, S, D), jnp.float32),
        grid_spec=grid_spec,
        compiler_params=pltpu.CompilerParams(
            dimension_semantics=("parallel", "parallel")),
    )(tok_ids,
      tok_tab.astype(jnp.float32),
      seg_ids3,
      pos_tab.astype(jnp.float32),
      seg_tab.astype(jnp.float32),
      gamma2, beta2)


def embedding_forward(x, seg, tok_tab, pos_tab, seg_tab, gamma, beta,
                      seq_tile=None):
    """x, seg: (B, S) int32.  Returns (B, S, D) float32."""
    _, S = x.shape
    if seq_tile is None:
        seq_tile = _pick_seq_tile(S)
    return _embedding_forward_impl(x, seg, tok_tab, pos_tab, seg_tab,
                                   gamma, beta, seq_tile)


def reference_forward(x, seg, tok_tab, pos_tab, seg_tab, gamma, beta):
    """Pure-JAX reference matching the PyTorch forward."""
    B, S = x.shape
    pos = jnp.broadcast_to(jnp.arange(S, dtype=jnp.int32)[None, :], (B, S))
    emb = tok_tab[x] + pos_tab[pos] + seg_tab[seg]
    mean = jnp.mean(emb, axis=-1, keepdims=True)
    var = jnp.mean((emb - mean) ** 2, axis=-1, keepdims=True)
    return (emb - mean) * lax.rsqrt(var + LN_EPS) * gamma + beta


if __name__ == "__main__":
    # Small, module-consistent shapes (real module: d_model=768, vocab/max_len from data)
    B, S, D = 2, 16, 128
    vocab_size, max_len, n_segments = 32, 16, 2

    key = jax.random.PRNGKey(0)
    k_tok, k_pos, k_seg, k_x, k_s = jax.random.split(key, 5)

    # nn.Embedding default init ~ N(0, 1); LayerNorm: gamma=1, beta=0
    tok_tab = jax.random.normal(k_tok, (vocab_size, D), dtype=jnp.float32)
    pos_tab = jax.random.normal(k_pos, (max_len, D), dtype=jnp.float32)
    seg_tab = jax.random.normal(k_seg, (n_segments, D), dtype=jnp.float32)
    gamma = jnp.ones((D,), dtype=jnp.float32)
    beta = jnp.zeros((D,), dtype=jnp.float32)

    x = jax.random.randint(k_x, (B, S), 0, vocab_size, dtype=jnp.int32)
    seg = jax.random.randint(k_s, (B, S), 0, n_segments, dtype=jnp.int32)

    # seq_tile=8 here to exercise multiple sequence tiles per batch row;
    # at real shapes the default picks up to 256 rows per grid step.
    out = embedding_forward(x, seg, tok_tab, pos_tab, seg_tab, gamma, beta,
                            seq_tile=8)
    out = jax.block_until_ready(out)

    ref = reference_forward(x, seg, tok_tab, pos_tab, seg_tab, gamma, beta)
    assert out.shape == (B, S, D)
    assert jnp.allclose(out, ref, atol=1e-5, rtol=1e-5), "mismatch vs reference"

    print("KERNEL_OK")
</pallas_src>

<mosaic_0001>
module attributes {stable_mosaic.version = 11 : i64} {
  func.func @_embedding_ln_kernel(%arg0: i32, %arg1: i32, %arg2: memref<2x16xi32, #tpu.memory_space<smem>>, %arg3: memref<32x128xf32, #tpu.memory_space<any>>, %arg4: memref<1x8x1xi32, #tpu.memory_space<vmem>>, %arg5: memref<8x128xf32, #tpu.memory_space<vmem>>, %arg6: memref<2x128xf32, #tpu.memory_space<vmem>>, %arg7: memref<1x128xf32, #tpu.memory_space<vmem>>, %arg8: memref<1x128xf32, #tpu.memory_space<vmem>>, %arg9: memref<1x8x128xf32, #tpu.memory_space<vmem>>, %arg10: memref<8x128xf32, #tpu.memory_space<vmem>>, %arg11: memref<8x!tpu.dma_semaphore, #tpu.memory_space<semaphore_mem>>) attributes {dimension_semantics = [#tpu.dimension_semantics<parallel>, #tpu.dimension_semantics<parallel>], iteration_bounds = array<i64: 2, 2>, scalar_prefetch = 1 : i64, scratch_operands = 2 : i64, tpu.core_type = #tpu.core_type<tc>, window_params = [{}, {transform_indices = @transform_1, window_bounds = array<i64: 1, 8, 1>}, {transform_indices = @transform_2, window_bounds = array<i64: 8, 128>}, {pipeline_mode = #tpu.pipeline_mode<synchronous>, transform_indices = @transform_3, window_bounds = array<i64: 2, 128>}, {pipeline_mode = #tpu.pipeline_mode<synchronous>, transform_indices = @transform_4, window_bounds = array<i64: 1, 128>}, {pipeline_mode = #tpu.pipeline_mode<synchronous>, transform_indices = @transform_5, window_bounds = array<i64: 1, 128>}, {transform_indices = @transform_6, window_bounds = array<i64: 1, 8, 128>}]} {
    %c8_i32 = arith.constant 8 : i32
    %0 = arith.muli %arg1, %c8_i32 : i32
    %c0_i32 = arith.constant 0 : i32
    %c8_i32_0 = arith.constant 8 : i32
    %1 = arith.addi %c0_i32, %c8_i32_0 : i32
    %c1_i32 = arith.constant 1 : i32
    scf.for %arg12 = %c0_i32 to %1 step %c1_i32  : i32 {
      %c1_i32_29 = arith.constant 1 : i32
      %51 = arith.muli %arg12, %c1_i32_29 : i32
      %c0_i32_30 = arith.constant 0 : i32
      %52 = arith.addi %c0_i32_30, %51 : i32
      %53 = arith.addi %0, %52 : i32
      %54 = arith.index_cast %arg0 : i32 to index
      %55 = arith.index_cast %53 : i32 to index
      %56 = memref.load %arg2[%54, %55] : memref<2x16xi32, #tpu.memory_space<smem>>
      %c0_i32_31 = arith.constant 0 : i32
      %57 = tpu.memref_slice %arg3[%56, %c0_i32_31] : memref<32x128xf32, #tpu.memory_space<any>> -> memref<1x128xf32, #tpu.memory_space<any>>
      %c0_i32_32 = arith.constant 0 : i32
      %58 = tpu.memref_slice %arg10[%52, %c0_i32_32] : memref<8x128xf32, #tpu.memory_space<vmem>> -> memref<1x128xf32, #tpu.memory_space<vmem>>
      %59 = tpu.memref_slice %arg11[%52] : memref<8x!tpu.dma_semaphore, #tpu.memory_space<semaphore_mem>> -> memref<1x!tpu.dma_semaphore, #tpu.memory_space<semaphore_mem>>
      %60 = tpu.memref_squeeze %59 : memref<1x!tpu.dma_semaphore, #tpu.memory_space<semaphore_mem>> -> memref<!tpu.dma_semaphore, #tpu.memory_space<semaphore_mem>>
      tpu.enqueue_dma source(%57 : memref<1x128xf32, #tpu.memory_space<any>>) target(%58 : memref<1x128xf32, #tpu.memory_space<vmem>>) target_semaphore(%60 : memref<!tpu.dma_semaphore, #tpu.memory_space<semaphore_mem>>)
    }
    %c8_i32_1 = arith.constant 8 : i32
    %c0_i32_2 = arith.constant 0 : i32
    %c8_i32_3 = arith.constant 8 : i32
    %2 = arith.addi %c0_i32_2, %c8_i32_3 : i32
    %c1_i32_4 = arith.constant 1 : i32
    scf.for %arg12 = %c0_i32_2 to %2 step %c1_i32_4  : i32 {
      %c1_i32_29 = arith.constant 1 : i32
      %51 = arith.muli %arg12, %c1_i32_29 : i32
      %c0_i32_30 = arith.constant 0 : i32
      %52 = arith.addi %c0_i32_30, %51 : i32
      %c0_i32_31 = arith.constant 0 : i32
      %c0_i32_32 = arith.constant 0 : i32
      %53 = tpu.memref_slice %arg3[%c0_i32_31, %c0_i32_32] : memref<32x128xf32, #tpu.memory_space<any>> -> memref<1x128xf32, #tpu.memory_space<any>>
      %c0_i32_33 = arith.constant 0 : i32
      %54 = tpu.memref_slice %arg10[%52, %c0_i32_33] : memref<8x128xf32, #tpu.memory_space<vmem>> -> memref<1x128xf32, #tpu.memory_space<vmem>>
      %55 = tpu.memref_slice %arg11[%52] : memref<8x!tpu.dma_semaphore, #tpu.memory_space<semaphore_mem>> -> memref<1x!tpu.dma_semaphore, #tpu.memory_space<semaphore_mem>>
      %56 = tpu.memref_squeeze %55 : memref<1x!tpu.dma_semaphore, #tpu.memory_space<semaphore_mem>> -> memref<!tpu.dma_semaphore, #tpu.memory_space<semaphore_mem>>
      tpu.wait_dma2 semaphore(%56 : memref<!tpu.dma_semaphore, #tpu.memory_space<semaphore_mem>>) src(%53 : memref<1x128xf32, #tpu.memory_space<any>>) dst(%54 : memref<1x128xf32, #tpu.memory_space<vmem>>)
    }
    %c8_i32_5 = arith.constant 8 : i32
    %c0 = arith.constant 0 : index
    %c0_6 = arith.constant 0 : index
    %3 = vector.load %arg10[%c0, %c0_6] : memref<8x128xf32, #tpu.memory_space<vmem>>, vector<8x128xf32>
    %c0_7 = arith.constant 0 : index
    %c0_8 = arith.constant 0 : index
    %4 = vector.load %arg5[%c0_7, %c0_8] : memref<8x128xf32, #tpu.memory_space<vmem>>, vector<8x128xf32>
    %c0_9 = arith.constant 0 : index
    %c0_10 = arith.constant 0 : index
    %c0_11 = arith.constant 0 : index
    %5 = vector.load %arg4[%c0_9, %c0_10, %c0_11] : memref<1x8x1xi32, #tpu.memory_space<vmem>>, vector<1x8x1xi32>
    %6 = vector.shape_cast %5 : vector<1x8x1xi32> to vector<8x1xi32>
    %cst = arith.constant 0.000000e+00 : f32
    %7 = vector.broadcast %cst : f32 to vector<8x128xf32>
    %c0_i32_12 = arith.constant 0 : i32
    %8 = vector.broadcast %c0_i32_12 : i32 to vector<8x1xi32>
    %9 = arith.cmpi eq, %6, %8 : vector<8x1xi32>
    %c0_13 = arith.constant 0 : index
    %c0_14 = arith.constant 0 : index
    %10 = vector.load %arg6[%c0_13, %c0_14] : memref<2x128xf32, #tpu.memory_space<vmem>>, vector<1x128xf32>
    %11 = vector.shape_cast %9 : vector<8x1xi1> to vector<8x1xi1>
    %12 = vector.broadcast %11 : vector<8x1xi1> to vector<8x128xi1>
    %13 = vector.shape_cast %10 : vector<1x128xf32> to vector<1x128xf32>
    %14 = vector.broadcast %13 : vector<1x128xf32> to vector<8x128xf32>
    %15 = arith.select %12, %14, %7 : vector<8x128xi1>, vector<8x128xf32>
    %c1_i32_15 = arith.constant 1 : i32
    %16 = vector.broadcast %c1_i32_15 : i32 to vector<8x1xi32>
    %17 = arith.cmpi eq, %6, %16 : vector<8x1xi32>
    %c1 = arith.constant 1 : index
    %c0_16 = arith.constant 0 : index
    %18 = vector.load %arg6[%c1, %c0_16] : memref<2x128xf32, #tpu.memory_space<vmem>>, vector<1x128xf32>
    %19 = vector.shape_cast %17 : vector<8x1xi1> to vector<8x1xi1>
    %20 = vector.broadcast %19 : vector<8x1xi1> to vector<8x128xi1>
    %21 = vector.shape_cast %18 : vector<1x128xf32> to vector<1x128xf32>
    %22 = vector.broadcast %21 : vector<1x128xf32> to vector<8x128xf32>
    %23 = arith.select %20, %22, %15 : vector<8x128xi1>, vector<8x128xf32>
    %24 = arith.addf %3, %4 : vector<8x128xf32>
    %25 = arith.addf %24, %23 : vector<8x128xf32>
    %cst_17 = arith.constant dense<0.000000e+00> : vector<8xf32>
    %26 = vector.multi_reduction <add>, %25, %cst_17 [1] : vector<8x128xf32> to vector<8xf32>
    %27 = vector.shape_cast %26 : vector<8xf32> to vector<8x1xf32>
    %cst_18 = arith.constant 1.280000e+02 : f32
    %28 = vector.broadcast %cst_18 : f32 to vector<8x1xf32>
    %29 = arith.divf %27, %28 : vector<8x1xf32>
    %30 = vector.broadcast %29 : vector<8x1xf32> to vector<8x128xf32>
    %31 = arith.subf %25, %30 : vector<8x128xf32>
    %32 = arith.mulf %31, %31 : vector<8x128xf32>
    %cst_19 = arith.constant dense<0.000000e+00> : vector<8xf32>
    %33 = vector.multi_reduction <add>, %32, %cst_19 [1] : vector<8x128xf32> to vector<8xf32>
    %34 = vector.shape_cast %33 : vector<8xf32> to vector<8x1xf32>
    %cst_20 = arith.constant 1.280000e+02 : f32
    %35 = vector.broadcast %cst_20 : f32 to vector<8x1xf32>
    %36 = arith.divf %34, %35 : vector<8x1xf32>
    %cst_21 = arith.constant 9.99999974E-6 : f32
    %37 = vector.broadcast %cst_21 : f32 to vector<8x1xf32>
    %38 = arith.addf %36, %37 : vector<8x1xf32>
    %39 = math.rsqrt %38 : vector<8x1xf32>
    %40 = vector.broadcast %39 : vector<8x1xf32> to vector<8x128xf32>
    %41 = arith.mulf %31, %40 : vector<8x128xf32>
    %c0_22 = arith.constant 0 : index
    %c0_23 = arith.constant 0 : index
    %42 = vector.load %arg7[%c0_22, %c0_23] : memref<1x128xf32, #tpu.memory_space<vmem>>, vector<1x128xf32>
    %43 = vector.broadcast %42 : vector<1x128xf32> to vector<8x128xf32>
    %44 = arith.mulf %41, %43 : vector<8x128xf32>
    %c0_24 = arith.constant 0 : index
    %c0_25 = arith.constant 0 : index
    %45 = vector.load %arg8[%c0_24, %c0_25] : memref<1x128xf32, #tpu.memory_space<vmem>>, vector<1x128xf32>
    %46 = vector.broadcast %45 : vector<1x128xf32> to vector<8x128xf32>
    %47 = arith.addf %44, %46 : vector<8x128xf32>
    %c0_26 = arith.constant 0 : index
    %c0_27 = arith.constant 0 : index
    %c0_28 = arith.constant 0 : index
    %48 = vector.load %arg9[%c0_26, %c0_27, %c0_28] : memref<1x8x128xf32, #tpu.memory_space<vmem>>, vector<1x8x128xf32>
    %49 = vector.shape_cast %48 : vector<1x8x128xf32> to vector<8x128xf32>
    %50 = vector.shape_cast %47 : vector<8x128xf32> to vector<1x8x128xf32>
    tpu.vector_store %arg9[%c0_26, %c0_27, %c0_28], %50 {strides = array<i32>} : memref<1x8x128xf32, #tpu.memory_space<vmem>>, vector<1x8x128xf32>,
    return
  }
  func.func @transform_1(%arg0: i32, %arg1: i32, %arg2: memref<2x16xi32, #tpu.memory_space<smem>>) -> (i32, i32, i32) {
    %c0_i32 = arith.constant 0 : i32
    %c0_i32_0 = arith.constant 0 : i32
    return %arg0, %arg1, %c0_i32 : i32, i32, i32
  }
  func.func @transform_2(%arg0: i32, %arg1: i32, %arg2: memref<2x16xi32, #tpu.memory_space<smem>>) -> (i32, i32) {
    %c0_i32 = arith.constant 0 : i32
    %c0_i32_0 = arith.constant 0 : i32
    return %arg1, %c0_i32 : i32, i32
  }
  func.func @transform_3(%arg0: i32, %arg1: i32, %arg2: memref<2x16xi32, #tpu.memory_space<smem>>) -> (i32, i32) {
    %c0_i32 = arith.constant 0 : i32
    %c0_i32_0 = arith.constant 0 : i32
    %c0_i32_1 = arith.constant 0 : i32
    return %c0_i32, %c0_i32_0 : i32, i32
  }
  func.func @transform_4(%arg0: i32, %arg1: i32, %arg2: memref<2x16xi32, #tpu.memory_space<smem>>) -> (i32, i32) {
    %c0_i32 = arith.constant 0 : i32
    %c0_i32_0 = arith.constant 0 : i32
    %c0_i32_1 = arith.constant 0 : i32
    return %c0_i32, %c0_i32_0 : i32, i32
  }
  func.func @transform_5(%arg0: i32, %arg1: i32, %arg2: memref<2x16xi32, #tpu.memory_space<smem>>) -> (i32, i32) {
    %c0_i32 = arith.constant 0 : i32
    %c0_i32_0 = arith.constant 0 : i32
    %c0_i32_1 = arith.constant 0 : i32
    return %c0_i32, %c0_i32_0 : i32, i32
  }
  func.func @transform_6(%arg0: i32, %arg1: i32, %arg2: memref<2x16xi32, #tpu.memory_space<smem>>) -> (i32, i32, i32) {
    %c0_i32 = arith.constant 0 : i32
    %c0_i32_0 = arith.constant 0 : i32
    return %arg0, %arg1, %c0_i32 : i32, i32, i32
  }
}

</mosaic_0001>

<llo_original>
// kernel: _embedding_forward_impl.1
$region0: #{_embedding_forward_impl.1}
  #allocation0 [shape = 'u32[]', space=smem, size = 0x4, offset = 0x4, fixed_abs, tag = 'smem constant byte address 0x4 - core index']
  #allocation1 [shape = 'u32[144,128]{1,0:T(1,128)}', space=vmem, size = 0x12000, scoped, tag = 'internal scratch']
  #allocation2 [shape = 'f32[8,128]{1,0:T(8,128)}', space=vmem, size = 0x1000, scoped, tag = 'scratch operand']
  #allocation3 [shape = 's32[8]{0}', space=sflag, size = 0x20, scoped, tag = 'scratch operand']
  #allocation4 [shape = 's32[1]{0}', space=sflag, size = 0x4, scoped, tag = 'scoped memory for _embedding_forward_impl.1']
  #allocation5 [shape = 'u8[1024]{0}', space=smem, size = 0x400, scoped, tag = 'prefetched SMEM operand 0']
  #allocation8 [shape = 's32[]', space=sflag, size = 0x4, offset = 0, fixed_abs, tag = 'sflag constant byte address 0x0 - dummy sync flag']
  %s0 = inlined_call_operand.vmem [shape: s32[2,16], index: 0, kind: input, shape index: {}]
  %s1 = inlined_call_operand.vmem [shape: f32[32,128], index: 1, kind: input, shape index: {}]
  %s2 = inlined_call_operand.vmem [shape: s32[2,16,1], index: 2, kind: input, shape index: {}]
  %s3 = inlined_call_operand.vmem [shape: f32[16,128], index: 3, kind: input, shape index: {}]
  %s4 = inlined_call_operand.vmem [shape: f32[2,128], index: 4, kind: input, shape index: {}]
  %s5 = inlined_call_operand.vmem [shape: f32[1,128], index: 5, kind: input, shape index: {}]
  %s6 = inlined_call_operand.vmem [shape: f32[1,128], index: 6, kind: input, shape index: {}]
  %s7 = inlined_call_operand.hbm [shape: f32[2,16,128], index: 7, kind: output, shape index: {}]
  %s8 = sld [smem:[#allocation0]]
  $region97: #{_embedding_forward_impl.1} parent=0
    _
  %s10 = ssub.s32 1, %s8
  %s11 = scalar_select 0, %s10, %s8
  %s12 = sshll.u32 %s0, 4
  %s13 = int_to_ptr.vmem [resolvable:$true] %s12
  %15 = dma.vmem_to_smem %s13, 32, [#allocation5], [#allocation4]
  %16 = dma.done [#allocation4], 32
  %17 = sfence
  $region1: #{_embedding_forward_impl.1} parent=0
    #allocation6 [shape = 'u8[8192]{0}', space=vmem, size = 0x2000, scoped, tag = 'output window, operand 0']
    #allocation7 [shape = 's32[2]{0}', space=sflag, size = 0x8, scoped, tag = 'scoped memory for _embedding_forward_impl.1']
    %18 = vsyncpa [#allocation7], 0
    %s19 = scalar_lea.sflag [#allocation7], 1
    %20 = vsyncpa %s19, 0
    loop: start=0, step=1, limit=6
    $region2: #{_embedding_forward_impl.1} parent=1 // loop_pre_header
      _
    $region3: #{_embedding_forward_impl.1} parent=1 // loop_header
      %s22 = sphi 0, %s26
      %p23 = scmp.ge.s32.totalorder %s22, 6
      %s29 = sphi 0, %s41
      %s30 = sphi 0, %s37
      %s31 = sphi 0, %s29
      %s32 = sphi 0, %s30
      %s33 = sphi 0, %s31
      %s34 = sphi 0, %s32
      %s46 = sphi 0, %s48
      %s49 = sphi 0, %s46
      %s50 = sphi 0, %s49
      %s66 = sphi 0, %s50
      %s72 = sphi 0, %s74
      %s75 = sphi 0, %s72
      %s76 = sphi 0, %s75
      %s92 = sphi 0, %s76
      %s96 = sphi 0, %s96
      %s98 = sphi 0, %s96
      %s99 = sphi 0, %s98
      %s113 = sphi 0, %s99
      %s117 = sphi 0, %s117
      %s119 = sphi 0, %s117
      %s120 = sphi 0, %s119
      %s134 = sphi 0, %s120
      %s138 = sphi 0, %s138
      %s140 = sphi 0, %s138
      %s141 = sphi 0, %s140
      %s155 = sphi 0, %s141
      %s163 = sphi 0, %s165
      %s166 = sphi 0, %s163
      %s167 = sphi 0, %s166
      %s183 = sphi 0, %s167
    $region4: #{_embedding_forward_impl.1} parent=1 // loop_header_branch
      %25 = sbr.rel (%p23) target = $region8
    $region5: #{_embedding_forward_impl.1} parent=1 // loop_body
      %s27 = ssub.s32 %s22, 1
      %s28 = ssub.s32 %s22, 2
      %s35 = sadd.s32 1, %s30
      %p36 = scmp.ge.s32.totalorder %s35, 2
      %s37 = scalar_select %p36, 0, %s35
      %s38 = sadd.s32 1, %s29
      %s39 = scalar_select %p36, %s38, %s29
      %p40 = scmp.ge.s32.totalorder %s39, 2
      %s41 = scalar_select %p40, 0, %s39
      %s42 = ssub.s32 %s29, %s41
      %s43 = ssub.s32 %s30, %s37
      %s44 = sor.u32 %s42, %s43
      %p45 = scmp.eq.s32.totalorder %s44, 0
      %s47 = sadd.s32 %s46, 1
      %s48 = scalar_select %p45, %s46, %s47
      %p51 = pneg %p45
      %p52 = scmp.eq.s32.totalorder %s22, 3
      %p53 = por %p51, %p52
      %p54 = scmp.ne.s32.totalorder %s46, %s49
      %p55 = scmp.eq.s32.totalorder %s22, 0
      %p56 = por %p54, %p55
      %p57 = scmp.ne.s32.totalorder %s46, %s49
      %p58 = scmp.eq.s32.totalorder %s27, 3
      %p59 = por %p57, %p58
      %p60 = scmp.ne.s32.totalorder %s49, %s50
      %p61 = scmp.eq.s32.totalorder %s27, 0
      %p62 = por %p60, %p61
      %p63 = scmp.ne.s32.totalorder %s49, %s50
      %p64 = scmp.eq.s32.totalorder %s28, 3
      %p65 = por %p63, %p64
      %p67 = scmp.ne.s32.totalorder %s50, %s66
      %p68 = scmp.eq.s32.totalorder %s28, 0
      %p69 = por %p67, %p68
      %s70 = ssub.s32 %s30, %s37
      %p71 = scmp.eq.s32.totalorder %s70, 0
      %s73 = sadd.s32 %s72, 1
      %s74 = scalar_select %p71, %s72, %s73
      %p77 = pneg %p71
      %p78 = scmp.eq.s32.totalorder %s22, 3
      %p79 = por %p77, %p78
      %p80 = scmp.ne.s32.totalorder %s72, %s75
      %p81 = scmp.eq.s32.totalorder %s22, 0
      %p82 = por %p80, %p81
      %p83 = scmp.ne.s32.totalorder %s72, %s75
      %p84 = scmp.eq.s32.totalorder %s27, 3
      %p85 = por %p83, %p84
      %p86 = scmp.ne.s32.totalorder %s75, %s76
      %p87 = scmp.eq.s32.totalorder %s27, 0
      %p88 = por %p86, %p87
      %p89 = scmp.ne.s32.totalorder %s75, %s76
      %p90 = scmp.eq.s32.totalorder %s28, 3
      %p91 = por %p89, %p90
      %p93 = scmp.ne.s32.totalorder %s76, %s92
      %p94 = scmp.eq.s32.totalorder %s28, 0
      %p95 = por %p93, %p94
      %s97 = sadd.s32 %s96, 1
      %p100 = scmp.eq.s32.totalorder %s22, 3
      %p101 = scmp.ne.s32.totalorder %s96, %s98
      %p102 = scmp.eq.s32.totalorder %s22, 0
      %p103 = por %p101, %p102
      %p104 = scmp.ne.s32.totalorder %s96, %s98
      %p105 = scmp.eq.s32.totalorder %s27, 3
      %p106 = por %p104, %p105
      %p107 = scmp.ne.s32.totalorder %s98, %s99
      %p108 = scmp.eq.s32.totalorder %s27, 0
      %p109 = por %p107, %p108
      %p110 = scmp.ne.s32.totalorder %s98, %s99
      %p111 = scmp.eq.s32.totalorder %s28, 3
      %p112 = por %p110, %p111
      %p114 = scmp.ne.s32.totalorder %s99, %s113
      %p115 = scmp.eq.s32.totalorder %s28, 0
      %p116 = por %p114, %p115
      %s118 = sadd.s32 %s117, 1
      %p121 = scmp.eq.s32.totalorder %s22, 3
      %p122 = scmp.ne.s32.totalorder %s117, %s119
      %p123 = scmp.eq.s32.totalorder %s22, 0
      %p124 = por %p122, %p123
      %p125 = scmp.ne.s32.totalorder %s117, %s119
      %p126 = scmp.eq.s32.totalorder %s27, 3
      %p127 = por %p125, %p126
      %p128 = scmp.ne.s32.totalorder %s119, %s120
      %p129 = scmp.eq.s32.totalorder %s27, 0
      %p130 = por %p128, %p129
      %p131 = scmp.ne.s32.totalorder %s119, %s120
      %p132 = scmp.eq.s32.totalorder %s28, 3
      %p133 = por %p131, %p132
      %p135 = scmp.ne.s32.totalorder %s120, %s134
      %p136 = scmp.eq.s32.totalorder %s28, 0
      %p137 = por %p135, %p136
      %s139 = sadd.s32 %s138, 1
      %p142 = scmp.eq.s32.totalorder %s22, 3
      %p143 = scmp.ne.s32.totalorder %s138, %s140
      %p144 = scmp.eq.s32.totalorder %s22, 0
      %p145 = por %p143, %p144
      %p146 = scmp.ne.s32.totalorder %s138, %s140
      %p147 = scmp.eq.s32.totalorder %s27, 3
      %p148 = por %p146, %p147
      %p149 = scmp.ne.s32.totalorder %s140, %s141
      %p150 = scmp.eq.s32.totalorder %s27, 0
      %p151 = por %p149, %p150
      %p152 = scmp.ne.s32.totalorder %s140, %s141
      %p153 = scmp.eq.s32.totalorder %s28, 3
      %p154 = por %p152, %p153
      %p156 = scmp.ne.s32.totalorder %s141, %s155
      %p157 = scmp.eq.s32.totalorder %s28, 0
      %p158 = por %p156, %p157
      %s159 = ssub.s32 %s29, %s41
      %s160 = ssub.s32 %s30, %s37
      %s161 = sor.u32 %s159, %s160
      %p162 = scmp.eq.s32.totalorder %s161, 0
      %s164 = sadd.s32 %s163, 1
      %s165 = scalar_select %p162, %s163, %s164
      %p168 = pneg %p162
      %p169 = scmp.eq.s32.totalorder %s22, 3
      %p170 = por %p168, %p169
      %p171 = scmp.ne.s32.totalorder %s163, %s166
      %p172 = scmp.eq.s32.totalorder %s22, 0
      %p173 = por %p171, %p172
      %p174 = scmp.ne.s32.totalorder %s163, %s166
      %p175 = scmp.eq.s32.totalorder %s27, 3
      %p176 = por %p174, %p175
      %p177 = scmp.ne.s32.totalorder %s166, %s167
      %p178 = scmp.eq.s32.totalorder %s27, 0
      %p179 = por %p177, %p178
      %p180 = scmp.ne.s32.totalorder %s166, %s167
      %p181 = scmp.eq.s32.totalorder %s28, 3
      %p182 = por %p180, %p181
      %p184 = scmp.ne.s32.totalorder %s167, %s183
      %p185 = scmp.eq.s32.totalorder %s28, 0
      %p186 = por %p184, %p185
      %p187 = scmp.le.s32.totalorder 1, %s22
      %p188 = scmp.lt.s32.totalorder %s22, 5
      %p189 = pnand %p187, %p188
      %p190 = pneg %p189
      // Predicated region
      $region9: #{_embedding_forward_impl.1} parent=5 // pred_check
        _
      $region10: #{_embedding_forward_impl.1} parent=5 // pred_check_branch
        %192 = sbr.rel (%p189) target = $region12
      $region11: #{_embedding_forward_impl.1} parent=5 // pred_region
        %s193 = ssub.s32 %s22, 1
        // Predicated region
        $region13: #{_embedding_forward_impl.1} parent=11 // pred_check
          %p194 = pneg %p109
        $region14: #{_embedding_forward_impl.1} parent=11 // pred_check_branch
          %196 = sbr.rel (%p194) target = $region16
        $region15: #{_embedding_forward_impl.1} parent=11 // pred_region
          _
        $region16: #{_embedding_forward_impl.1} parent=11 // pred_fallthru
          _
        // Predicated region
        $region17: #{_embedding_forward_impl.1} parent=11 // pred_check
          %p197 = pneg %p130
        $region18: #{_embedding_forward_impl.1} parent=11 // pred_check_branch
          %199 = sbr.rel (%p197) target = $region20
        $region19: #{_embedding_forward_impl.1} parent=11 // pred_region
          _
        $region20: #{_embedding_forward_impl.1} parent=11 // pred_fallthru
          _
        // Predicated region
        $region21: #{_embedding_forward_impl.1} parent=11 // pred_check
          %p200 = pneg %p151
        $region22: #{_embedding_forward_impl.1} parent=11 // pred_check_branch
          %202 = sbr.rel (%p200) target = $region24
        $region23: #{_embedding_forward_impl.1} parent=11 // pred_region
          _
        $region24: #{_embedding_forward_impl.1} parent=11 // pred_fallthru
          _
      $region12: #{_embedding_forward_impl.1} parent=5 // pred_fallthru
        _
      %p203 = scmp.lt.s32.totalorder %s22, 4
      // Predicated region
      $region25: #{_embedding_forward_impl.1} parent=5 // pred_check
        %p204 = pneg %p203
      $region26: #{_embedding_forward_impl.1} parent=5 // pred_check_branch
        %206 = sbr.rel (%p204) target = $region28
      $region27: #{_embedding_forward_impl.1} parent=5 // pred_region
        // Predicated region
        $region29: #{_embedding_forward_impl.1} parent=27 // pred_check
          %p207 = pneg %p56
        $region30: #{_embedding_forward_impl.1} parent=27 // pred_check_branch
          %209 = sbr.rel (%p207) target = $region32
        $region31: #{_embedding_forward_impl.1} parent=27 // pred_region
          %p210 = scmp.lt.s32.totalorder %s29, 1
          %s211 = scalar_select %p210, %s29, 1
          %p212 = scmp.lt.s32.totalorder %s30, 1
          %s213 = scalar_select %p212, %s30, 1
          %s214 = smul.addr %s211, 2
          %s215 = sadd.s32 %s213, %s214
          %s216 = smul.addr %s215, 8
          %s217 = scalar_lea.vmem %s2, %s216
        $region32: #{_embedding_forward_impl.1} parent=27 // pred_fallthru
          _
        // Predicated region
        $region33: #{_embedding_forward_impl.1} parent=27 // pred_check
          %p218 = pneg %p82
        $region34: #{_embedding_forward_impl.1} parent=27 // pred_check_branch
          %220 = sbr.rel (%p218) target = $region36
        $region35: #{_embedding_forward_impl.1} parent=27 // pred_region
          %p221 = scmp.lt.s32.totalorder %s30, 1
          %s222 = scalar_select %p221, %s30, 1
          %s223 = smul.addr %s222, 8
          %s224 = scalar_lea.vmem %s3, %s223
        $region36: #{_embedding_forward_impl.1} parent=27 // pred_fallthru
          _
      $region28: #{_embedding_forward_impl.1} parent=5 // pred_fallthru
        _
      %p225 = scmp.le.s32.totalorder 1, %s22
      %p226 = scmp.lt.s32.totalorder %s22, 5
      %p227 = pnand %p225, %p226
      %p228 = pneg %p227
      // Predicated region
      $region37: #{_embedding_forward_impl.1} parent=5 // pred_check
        _
      $region38: #{_embedding_forward_impl.1} parent=5 // pred_check_branch
        %230 = sbr.rel (%p227) target = $region40
      $region39: #{_embedding_forward_impl.1} parent=5 // pred_region
        %s231 = ssub.s32 %s22, 1
        %p232 = scmp.lt.s32.totalorder %s31, 1
        %s233 = scalar_select %p232, %s31, 1
        %p234 = scmp.lt.s32.totalorder %s32, 1
        %s235 = scalar_select %p234, %s32, 1
        %s236 = smul.addr %s233, 2
        %s237 = sadd.s32 %s235, %s236
        %s238 = smul.addr %s237, 8
        %s239 = scalar_lea.vmem %s2, %s238
        %p240 = pneg %p62
        %p241 = pneg %p59
        %p242 = scmp.lt.s32.totalorder %s32, 1
        %s243 = scalar_select %p242, %s32, 1
        %s244 = smul.addr %s243, 8
        %s245 = scalar_lea.vmem %s3, %s244
        %p246 = pneg %p88
        %p247 = pneg %p85
        %p248 = pneg %p109
        %p249 = pneg %p106
        %p250 = pneg %p130
        %p251 = pneg %p127
        %p252 = pneg %p151
        %p253 = pneg %p148
        %p254 = pneg %p179
        %p255 = pneg %p176
        %s256 = sand.u32 %s166, 1
        %s257 = scalar_lea.sflag [#allocation7], %s256
        %s258 = sand.u32 %s166, 1
        %s259 = smul.addr %s258, 8
        %s260 = scalar_lea.vmem [#allocation6], %s259
        %p261 = scmp.lt.s32.totalorder %s31, 1
        %s262 = scalar_select %p261, %s31, 1
        %p263 = scmp.lt.s32.totalorder %s32, 1
        %s264 = scalar_select %p263, %s32, 1
        %s265 = smul.addr %s262, 2
        %s266 = sadd.s32 %s264, %s265
        %s267 = smul.addr %s266, 8
        %s268 = scalar_lea.vmem %s2, %s267
        %p269 = scmp.lt.s32.totalorder %s32, 1
        %s270 = scalar_select %p269, %s32, 1
        %s271 = smul.addr %s270, 8
        %s272 = scalar_lea.vmem %s3, %s271
        %s273 = smul.u32 %s32, 8
        loop: start=0, step=1, limit=8
        $region41: #{_embedding_forward_impl.1} parent=39 // loop_pre_header
          _
        $region42: #{_embedding_forward_impl.1} parent=39 // loop_header
          %s275 = sphi 0, %s279
          %p276 = scmp.ge.s32.totalorder %s275, 8
        $region43: #{_embedding_forward_impl.1} parent=39 // loop_header_branch
          %278 = sbr.rel (%p276) target = $region47
        $region44: #{_embedding_forward_impl.1} parent=39 // loop_body
          %s280 = sadd.s32 %s273, %s275
          %s281 = sshra.s32 %s280, 7
          %s282 = sand.u32 %s280, 127
          %s283 = sadd.s32 %s281, %s31
          %s284 = smul.u32 %s283, 128
          %s285 = sshra.s32 %s280, 7
          %s286 = sand.u32 %s280, 127
          %s287 = sadd.s32 %s284, %s286
          %s288 = sld [smem:[#allocation5 + %s287]]
          %s289 = scalar_lea.vmem %s1, %s288
          %s290 = scalar_lea.vmem [#allocation2], %s275
          %s291 = scalar_lea.sflag [#allocation3], %s275
          %p293 = scmp.lt.u32.totalorder 1, 8
          %p294 = pneg %p293
          // Predicated region
          $region48: #{_embedding_forward_impl.1} parent=44 // pred_check
            _
          $region49: #{_embedding_forward_impl.1} parent=44 // pred_check_branch
            %296 = sbr.rel (%p293) target = $region51
          $region50: #{_embedding_forward_impl.1} parent=44 // pred_region
            %s311 = sand.u32 1, 7
            %p312 = scmp.eq.s32.totalorder %s311, 0
            %p313 = pneg %p312
            // Predicated region
            $region63: #{_embedding_forward_impl.1} parent=50 // pred_check
              _
            $region64: #{_embedding_forward_impl.1} parent=50 // pred_check_branch
              %315 = sbr.rel (%p312) target = $region66
            $region65: #{_embedding_forward_impl.1} parent=50 // pred_region
              %s316 = sand.u32 1, 7
              %s317 = ssub.s32 1, %s316
              %s318 = scalar_lea.vmem %s289, %s317
              %s319 = ssub.s32 1, %s316
              %s320 = scalar_lea.vmem %s290, %s319 [#allocation2]
              %s321 = sshllo.u32 0, %s316
              loop: start=0, step=1, limit=1
              $region67: #{_embedding_forward_impl.1} parent=65 // loop_pre_header
                _
              $region68: #{_embedding_forward_impl.1} parent=65 // loop_header
                %s323 = sphi 0, %s327
                %p324 = scmp.ge.s32.totalorder %s323, 1
                %s328 = sphi %s318, %s318
                %s329 = sphi %s320, %s320
              $region69: #{_embedding_forward_impl.1} parent=65 // loop_header_branch
                %326 = sbr.rel (%p324) target = $region73
              $region70: #{_embedding_forward_impl.1} parent=65 // loop_body
                %v330 = vld [vmem:[%s328] sm:%s321]
                %331 = vst [vmem:[%s329] sm:%s321] %v330
              $region71: #{_embedding_forward_impl.1} parent=65 // loop_footer
                %s327 = sadd.s32 1, %s323
              $region72: #{_embedding_forward_impl.1} parent=65 // loop_footer_branch
                %322 = sbr.rel target = $region68
              $region73: #{_embedding_forward_impl.1} parent=65 // loop_exit
                _
            $region66: #{_embedding_forward_impl.1} parent=50 // pred_fallthru
              _
          $region51: #{_embedding_forward_impl.1} parent=44 // pred_fallthru
            _
          // Predicated region
          $region52: #{_embedding_forward_impl.1} parent=44 // pred_check
            %p297 = pneg %p293
          $region53: #{_embedding_forward_impl.1} parent=44 // pred_check_branch
            %299 = sbr.rel (%p297) target = $region55
          $region54: #{_embedding_forward_impl.1} parent=44 // pred_region
            %s300 = sshllo.u32 0, 1
            loop: start=0, step=1, limit=1
            $region56: #{_embedding_forward_impl.1} parent=54 // loop_pre_header
              _
            $region57: #{_embedding_forward_impl.1} parent=54 // loop_header
              %s302 = sphi 0, %s306
              %p303 = scmp.ge.s32.totalorder %s302, 1
              %s307 = sphi %s289, %s289
              %s308 = sphi %s290, %s290
            $region58: #{_embedding_forward_impl.1} parent=54 // loop_header_branch
              %305 = sbr.rel (%p303) target = $region62
            $region59: #{_embedding_forward_impl.1} parent=54 // loop_body
              %v309 = vld [vmem:[%s307] sm:%s300]
              %310 = vst [vmem:[%s308] sm:%s300] %v309
            $region60: #{_embedding_forward_impl.1} parent=54 // loop_footer
              %s306 = sadd.s32 1, %s302
            $region61: #{_embedding_forward_impl.1} parent=54 // loop_footer_branch
              %301 = sbr.rel target = $region57
            $region62: #{_embedding_forward_impl.1} parent=54 // loop_exit
              _
          $region55: #{_embedding_forward_impl.1} parent=44 // pred_fallthru
            _
          // Predicated region
          $region74: #{_embedding_forward_impl.1} parent=44 // pred_check
            _
          $region75: #{_embedding_forward_impl.1} parent=44 // pred_check_branch
            %334 = sbr.rel (0) target = $region77
          $region76: #{_embedding_forward_impl.1} parent=44 // pred_region
            %335 = vsyncadd %s291, 16
          $region77: #{_embedding_forward_impl.1} parent=44 // pred_fallthru
            _
        $region45: #{_embedding_forward_impl.1} parent=39 // loop_footer
          %s279 = sadd.s32 1, %s275
        $region46: #{_embedding_forward_impl.1} parent=39 // loop_footer_branch
          %274 = sbr.rel target = $region42
        $region47: #{_embedding_forward_impl.1} parent=39 // loop_exit
          _
        loop: start=0, step=1, limit=8
        $region78: #{_embedding_forward_impl.1} parent=39 // loop_pre_header
          _
        $region79: #{_embedding_forward_impl.1} parent=39 // loop_header
          %s337 = sphi 0, %s341
          %p338 = scmp.ge.s32.totalorder %s337, 8
        $region80: #{_embedding_forward_impl.1} parent=39 // loop_header_branch
          %340 = sbr.rel (%p338) target = $region84
        $region81: #{_embedding_forward_impl.1} parent=39 // loop_body
          %s342 = scalar_lea.sflag [#allocation3], %s337
          %s343 = smul.u32 1, 1
          %s344 = sshll.u32 %s343, 4
          %345 = dma.done %s342, %s344
        $region82: #{_embedding_forward_impl.1} parent=39 // loop_footer
          %s341 = sadd.s32 1, %s337
        $region83: #{_embedding_forward_impl.1} parent=39 // loop_footer_branch
          %336 = sbr.rel target = $region79
        $region84: #{_embedding_forward_impl.1} parent=39 // loop_exit
          _
        %v346 = vld [vmem:[#allocation2] sm:$0xff]
        %v347 = vld [vmem:[%s272] sm:$0xff]
        %v348 = vld [vmem:[%s268] sm:$0xff]
        %vm349 = vcmp.eq.s32.totalorder %v348, 0
        %v350 = vld [vmem:[%s4] sm:$0x1]
        %v351 = vsel %vm349, 1, 0
        %352 = vset.pattern.permute.xlu0 0
        %353 = vperm.xlu0 %352, %v351
        %v354 = vpop.permute.xlu0 %353
        %vm355 = vcmp.eq.s32.totalorder %v354, 1
        %v356 = vlaneseq
        %v357 = vshrl.u32 %v356, 7
        %v358 = vsub.s32 0, %v357
        %v359 = vrot.slane %v350, %v358
        %v360 = vsel %vm355, %v359, 0.0
        %vm361 = vcmp.eq.s32.totalorder %v348, 1
        %v362 = vld [vmem:[%s4 + $0x1] sm:$0x1]
        %v363 = vsel %vm361, 1, 0
        %364 = vset.pattern.permute.xlu0 0
        %365 = vperm.xlu0 %364, %v363
        %v366 = vpop.permute.xlu0 %365
        %vm367 = vcmp.eq.s32.totalorder %v366, 1
        %v368 = vlaneseq
        %v369 = vshrl.u32 %v368, 7
        %v370 = vsub.s32 0, %v369
        %v371 = vrot.slane %v362, %v370
        %v372 = vsel %vm367, %v371, %v360
        %v373 = vadd.f32 %v346, %v347
        %v374 = vadd.f32 %v373, %v372
        %375 = vadd.xlane.f32.xlu0 %v374
        %v376 = vpop.xlane.xlu0 %375
        %v377 = vrcp.pop 128.0
        %v378 = vmul.f32 %v376, %v377
        %v379 = vsub.f32 %v374, %v378
        %v380 = vmul.f32 %v379, %v379
        %381 = vadd.xlane.f32.xlu0 %v380
        %v382 = vpop.xlane.xlu0 %381
        %v383 = vmul.f32 %v382, %v377
        %v384 = vadd.f32 %v383, 1e-05
        %v385 = vrsqrt.pop %v384
        %v386 = vmul.f32 %v379, %v385
        %v387 = vld [vmem:[%s5] sm:$0x1]
        %v389 = vlaneseq
        %v390 = vshrl.u32 %v389, 7
        %v391 = vsub.s32 0, %v390
        %v392 = vrot.slane %v387, %v391
        %v394 = vmul.f32 %v386, %v392
        %v395 = vld [vmem:[%s6] sm:$0x1]
        %v397 = vlaneseq
        %v398 = vshrl.u32 %v397, 7
        %v399 = vsub.s32 0, %v398
        %v400 = vrot.slane %v395, %v399
        %v402 = vadd.f32 %v394, %v400
        %403 = vst [vmem:[%s260] sm:$0xff] %v402
        %s404 = sand.u32 %s166, 1
        %s405 = scalar_lea.sflag [#allocation7], %s404
        %s406 = sand.u32 %s166, 1
        %s407 = smul.addr %s406, 8
        %s408 = scalar_lea.vmem [#allocation6], %s407
        // Predicated region
        $region85: #{_embedding_forward_impl.1} parent=39 // pred_check
          %p409 = pneg %p176
        $region86: #{_embedding_forward_impl.1} parent=39 // pred_check_branch
          %411 = sbr.rel (%p409) target = $region88
        $region87: #{_embedding_forward_impl.1} parent=39 // pred_region
          %s413 = ssub.s32 128, 128
          %414 = vsyncadd %s405, %s413
          %s415 = smul.addr %s31, 2
          %s416 = sadd.s32 %s32, %s415
          %s417 = smul.addr %s416, 128
          %s418 = scalar_lea.hbm %s7, %s417
          %s420 = sshll.u32 %s408, 4
          %s421 = int_to_ptr.vmem [resolvable:$true] %s420
          %423 = dma.vmem_to_hbm [thread:$0]  %s421, 128, %s418, %s405
        $region88: #{_embedding_forward_impl.1} parent=39 // pred_fallthru
          _
      $region40: #{_embedding_forward_impl.1} parent=5 // pred_fallthru
        _
      %p424 = scmp.le.s32.totalorder 2, %s22
      // Predicated region
      $region89: #{_embedding_forward_impl.1} parent=5 // pred_check
        %p425 = pneg %p424
      $region90: #{_embedding_forward_impl.1} parent=5 // pred_check_branch
        %427 = sbr.rel (%p425) target = $region92
      $region91: #{_embedding_forward_impl.1} parent=5 // pred_region
        %s428 = ssub.s32 %s22, 2
        // Predicated region
        $region93: #{_embedding_forward_impl.1} parent=91 // pred_check
          %p429 = pneg %p182
        $region94: #{_embedding_forward_impl.1} parent=91 // pred_check_branch
          %431 = sbr.rel (%p429) target = $region96
        $region95: #{_embedding_forward_impl.1} parent=91 // pred_region
          %s432 = sand.u32 %s167, 1
          %s433 = scalar_lea.sflag [#allocation7], %s432
          %s434 = sand.u32 %s167, 1
          %s435 = smul.addr %s434, 8
          %s436 = scalar_lea.vmem [#allocation6], %s435
          %437 = dma.done %s433, 128
        $region96: #{_embedding_forward_impl.1} parent=91 // pred_fallthru
          _
      $region92: #{_embedding_forward_impl.1} parent=5 // pred_fallthru
        _
    $region6: #{_embedding_forward_impl.1} parent=1 // loop_footer
      %s26 = sadd.s32 1, %s22
    $region7: #{_embedding_forward_impl.1} parent=1 // loop_footer_branch
      %21 = sbr.rel target = $region3
    $region8: #{_embedding_forward_impl.1} parent=1 // loop_exit
      _
    %438 = vsyncpa [#allocation7], 1
    %s439 = scalar_lea.sflag [#allocation7], 1
    %440 = vsyncpa %s439, 1
  %441 = vsyncmov [#allocation3]
  %s442 = vpop.sfrf %441
  %p443 = scmp.eq.s32.totalorder %s442, 0
  %p444 = pneg %p443
  %446 = shalt.err (%p444)
  %s447 = scalar_lea.sflag [#allocation3], 1
  %448 = vsyncmov %s447
  %s449 = vpop.sfrf %448
  %p450 = scmp.eq.s32.totalorder %s449, 0
  %p451 = pneg %p450
  %453 = shalt.err (%p451)
  %s454 = scalar_lea.sflag [#allocation3], 2
  %455 = vsyncmov %s454
  %s456 = vpop.sfrf %455
  %p457 = scmp.eq.s32.totalorder %s456, 0
  %p458 = pneg %p457
  %460 = shalt.err (%p458)
  %s461 = scalar_lea.sflag [#allocation3], 3
  %462 = vsyncmov %s461
  %s463 = vpop.sfrf %462
  %p464 = scmp.eq.s32.totalorder %s463, 0
  %p465 = pneg %p464
  %467 = shalt.err (%p465)
  %s468 = scalar_lea.sflag [#allocation3], 4
  %469 = vsyncmov %s468
  %s470 = vpop.sfrf %469
  %p471 = scmp.eq.s32.totalorder %s470, 0
  %p472 = pneg %p471
  %474 = shalt.err (%p472)
  %s475 = scalar_lea.sflag [#allocation3], 5
  %476 = vsyncmov %s475
  %s477 = vpop.sfrf %476
  %p478 = scmp.eq.s32.totalorder %s477, 0
  %p479 = pneg %p478
  %481 = shalt.err (%p479)
  %s482 = scalar_lea.sflag [#allocation3], 6
  %483 = vsyncmov %s482
  %s484 = vpop.sfrf %483
  %p485 = scmp.eq.s32.totalorder %s484, 0
  %p486 = pneg %p485
  %488 = shalt.err (%p486)
  %s489 = scalar_lea.sflag [#allocation3], 7
  %490 = vsyncmov %s489
  %s491 = vpop.sfrf %490
  %p492 = scmp.eq.s32.totalorder %s491, 0
  %p493 = pneg %p492
  %495 = shalt.err (%p493)

</llo_original>
